<compile_context>
chip_gen: v7x
topology: tpu7x:2x2x1
jax: 0.10.0
libtpu: 0.0.40
codegen_flags: <defaults>
</compile_context>

<pallas_src>
import jax
import jax.numpy as jnp
from jax.experimental import pallas as pl
from jax.experimental.pallas import tpu as pltpu


def _pointgencon_kernel(
    x_ref,
    w1_ref, t1_ref,
    w2_ref, t2_ref,
    w3_ref, t3_ref,
    w4_ref, b4_ref,
    o_ref,
):
  """One (channels, point-tile) slab of one batch element.

  Channels contract on sublanes, points stay on lanes -> lane-dense output.
  BN scale is pre-folded into the weights; only the folded shift (f32) is added.
  """
  cdt = w1_ref.dtype  # matmul operand dtype (bf16 by default, f32 optional)

  # Layer 1: conv1(1x1) + bn1 + relu
  h = jnp.dot(w1_ref[...], x_ref[...], preferred_element_type=jnp.float32)
  h = jnp.maximum(h + t1_ref[...], 0.0).astype(cdt)
  # Layer 2: conv2 + bn2 + relu
  h = jnp.dot(w2_ref[...], h, preferred_element_type=jnp.float32)
  h = jnp.maximum(h + t2_ref[...], 0.0).astype(cdt)
  # Layer 3: conv3 + bn3 + relu
  h = jnp.dot(w3_ref[...], h, preferred_element_type=jnp.float32)
  h = jnp.maximum(h + t3_ref[...], 0.0).astype(cdt)
  # Layer 4: conv4 + 2*tanh
  y = jnp.dot(w4_ref[...], h, preferred_element_type=jnp.float32) + b4_ref[...]
  o_ref[...] = (2.0 * jnp.tanh(y)).astype(o_ref.dtype)


def _fold_bn(conv_bias, gamma, beta, running_mean, running_var, eps=1e-5):
  """Fold conv bias + BatchNorm1d (inference) into per-channel scale/shift."""
  scale = gamma / jnp.sqrt(running_var + eps)
  shift = (conv_bias - running_mean) * scale + beta
  return scale, shift


def _pick_point_tile(n, target=512):
  """Largest multiple-of-128 divisor of n that is <= target, else n (full axis)."""
  if n <= target:
    return n
  t = (target // 128) * 128
  while t >= 128:
    if n % t == 0:
      return t
    t -= 128
  return n  # fallback: whole point axis in one block (still lane-dense)


def pointgencon_forward(x, params, *, tn=None, compute_dtype=jnp.bfloat16):
  """PointGenCon forward.  x: (B, C, N) float32 (PyTorch NCL).  Returns (B, 3, N)."""
  B, C, N = x.shape
  assert C % 4 == 0, "bottleneck_size must be divisible by 4"
  if tn is None:
    tn = _pick_point_tile(N)
  assert N % tn == 0 and (tn == N or tn % 128 == 0)

  # --- host-side prep: fold BN scale into weights, cast matmul operands -----
  s1, t1 = _fold_bn(params["b1"], params["g1"], params["be1"],
                    params["m1"], params["v1"])
  s2, t2 = _fold_bn(params["b2"], params["g2"], params["be2"],
                    params["m2"], params["v2"])
  s3, t3 = _fold_bn(params["b3"], params["g3"], params["be3"],
                    params["m3"], params["v3"])

  w1 = (params["w1"] * s1[:, None]).astype(compute_dtype)   # (C,    C)
  w2 = (params["w2"] * s2[:, None]).astype(compute_dtype)   # (C//2, C)
  w3 = (params["w3"] * s3[:, None]).astype(compute_dtype)   # (C//4, C//2)
  w4 = params["w4"].astype(compute_dtype)                   # (3,    C//4)

  col = lambda v: v.reshape(-1, 1).astype(jnp.float32)      # (Cout,) -> (Cout, 1)
  t1c, t2c, t3c, b4c = col(t1), col(t2), col(t3), col(params["b4"])

  xc = x.astype(compute_dtype)

  # --- VMEM budget (weights resident, x/out tiles streamed, f32 intermediates)
  cb = jnp.dtype(compute_dtype).itemsize
  est = 2 * (w1.size + w2.size + w3.size + w4.size) * cb
  est += 2 * (t1c.size + t2c.size + t3c.size + b4c.size) * 4
  est += 2 * (C * tn * cb + 3 * tn * 4)
  est += (C + C // 2 + C // 4) * tn * 4
  vmem_limit = None
  if est > 32 * 1024 * 1024:
    # stay under v7x's 64 MiB physical VMEM; shrink tn if this ever binds.
    vmem_limit = min(int(est * 1.25), 64 * 1024 * 1024)

  def const_spec(arr):
    return pl.BlockSpec(arr.shape, lambda b, n: (0, 0))

  out = pl.pallas_call(
      _pointgencon_kernel,
      out_shape=jax.ShapeDtypeStruct((B, 3, N), jnp.float32),
      grid_spec=pltpu.PrefetchScalarGridSpec(
          num_scalar_prefetch=0,
          grid=(B, N // tn),
          in_specs=[
              pl.BlockSpec((None, C, tn), lambda b, n: (b, 0, n)),   # x tile
              const_spec(w1), const_spec(t1c),
              const_spec(w2), const_spec(t2c),
              const_spec(w3), const_spec(t3c),
              const_spec(w4), const_spec(b4c),
          ],
          out_specs=pl.BlockSpec((None, 3, tn), lambda b, n: (b, 0, n)),
      ),
      compiler_params=pltpu.CompilerParams(
          dimension_semantics=("parallel", "parallel"),
          vmem_limit_bytes=vmem_limit),
  )(xc, w1, t1c, w2, t2c, w3, t3c, w4, b4c)

  return out


def _reference_forward(x, params, eps=1e-5):
  """Pure-JAX reference with identical (inference-mode BN) semantics."""
  def conv1x1(h, w, b):  # h: (B, Cin, N), w: (Cout, Cin)
    return jnp.einsum("oc,bcn->bon", w, h) + b[None, :, None]

  def bn(h, g, be, m, v):
    return (h - m[None, :, None]) / jnp.sqrt(v[None, :, None] + eps) \
        * g[None, :, None] + be[None, :, None]

  h = jax.nn.relu(bn(conv1x1(x, params["w1"], params["b1"]),
                     params["g1"], params["be1"], params["m1"], params["v1"]))
  h = jax.nn.relu(bn(conv1x1(h, params["w2"], params["b2"]),
                     params["g2"], params["be2"], params["m2"], params["v2"]))
  h = jax.nn.relu(bn(conv1x1(h, params["w3"], params["b3"]),
                     params["g3"], params["be3"], params["m3"], params["v3"]))
  return 2.0 * jnp.tanh(conv1x1(h, params["w4"], params["b4"]))


def _init_params(key, bottleneck):
  C = bottleneck
  dims = [(C, C), (C // 2, C), (C // 4, C // 2), (3, C // 4)]
  params = {}
  keys = jax.random.split(key, 32)
  ki = iter(range(32))
  for li, (co, ci) in enumerate(dims, start=1):
    bound = 1.0 / (ci ** 0.5)  # PyTorch Conv1d default init range
    params[f"w{li}"] = jax.random.uniform(
        keys[next(ki)], (co, ci), jnp.float32, -bound, bound)
    params[f"b{li}"] = jax.random.uniform(
        keys[next(ki)], (co,), jnp.float32, -bound, bound)
  for li, co in enumerate([C, C // 2, C // 4], start=1):
    params[f"g{li}"] = 1.0 + 0.1 * jax.random.normal(keys[next(ki)], (co,), jnp.float32)
    params[f"be{li}"] = 0.1 * jax.random.normal(keys[next(ki)], (co,), jnp.float32)
    params[f"m{li}"] = 0.05 * jax.random.normal(keys[next(ki)], (co,), jnp.float32)
    params[f"v{li}"] = jax.random.uniform(keys[next(ki)], (co,), jnp.float32, 0.5, 1.5)
  return params


if __name__ == "__main__":
  # Small, module-consistent shapes: bottleneck_size must be divisible by 4.
  B, C, N = 2, 32, 16          # x: (batch, bottleneck_size, num_points)
  key = jax.random.PRNGKey(0)
  kx, kp = jax.random.split(key)
  x = jax.random.normal(kx, (B, C, N), jnp.float32)
  params = _init_params(kp, C)

  ref = jax.block_until_ready(_reference_forward(x, params))

  # f32 matmul path: must match the pure-JAX reference tightly.
  out_f32 = jax.block_until_ready(
      pointgencon_forward(x, params, compute_dtype=jnp.float32))
  assert out_f32.shape == (B, 3, N), out_f32.shape
  assert jnp.allclose(out_f32, ref, atol=1e-5, rtol=1e-5), \
      float(jnp.max(jnp.abs(out_f32 - ref)))

  # Default fast path (bf16 matmul operands, f32 accumulate/elementwise).
  out_bf16 = jax.block_until_ready(pointgencon_forward(x, params))
  assert out_bf16.shape == (B, 3, N), out_bf16.shape
  assert jnp.allclose(out_bf16, ref, atol=1e-1, rtol=1e-1), \
      float(jnp.max(jnp.abs(out_bf16 - ref)))

  print("KERNEL_OK")
</pallas_src>

<mosaic_0001>
module attributes {stable_mosaic.version = 11 : i64} {
  func.func @_pointgencon_kernel(%arg0: i32, %arg1: i32, %arg2: memref<1x32x16xf32, #tpu.memory_space<vmem>>, %arg3: memref<32x32xf32, #tpu.memory_space<vmem>>, %arg4: memref<32x1xf32, #tpu.memory_space<vmem>>, %arg5: memref<16x32xf32, #tpu.memory_space<vmem>>, %arg6: memref<16x1xf32, #tpu.memory_space<vmem>>, %arg7: memref<8x16xf32, #tpu.memory_space<vmem>>, %arg8: memref<8x1xf32, #tpu.memory_space<vmem>>, %arg9: memref<3x8xf32, #tpu.memory_space<vmem>>, %arg10: memref<3x1xf32, #tpu.memory_space<vmem>>, %arg11: memref<1x3x16xf32, #tpu.memory_space<vmem>>) attributes {dimension_semantics = [#tpu.dimension_semantics<parallel>, #tpu.dimension_semantics<parallel>], iteration_bounds = array<i64: 2, 1>, scalar_prefetch = 0 : i64, scratch_operands = 0 : i64, tpu.core_type = #tpu.core_type<tc>, window_params = [{transform_indices = @transform_0, window_bounds = array<i64: 1, 32, 16>}, {pipeline_mode = #tpu.pipeline_mode<synchronous>, transform_indices = @transform_1, window_bounds = array<i64: 32, 32>}, {pipeline_mode = #tpu.pipeline_mode<synchronous>, transform_indices = @transform_2, window_bounds = array<i64: 32, 1>}, {pipeline_mode = #tpu.pipeline_mode<synchronous>, transform_indices = @transform_3, window_bounds = array<i64: 16, 32>}, {pipeline_mode = #tpu.pipeline_mode<synchronous>, transform_indices = @transform_4, window_bounds = array<i64: 16, 1>}, {pipeline_mode = #tpu.pipeline_mode<synchronous>, transform_indices = @transform_5, window_bounds = array<i64: 8, 16>}, {pipeline_mode = #tpu.pipeline_mode<synchronous>, transform_indices = @transform_6, window_bounds = array<i64: 8, 1>}, {pipeline_mode = #tpu.pipeline_mode<synchronous>, transform_indices = @transform_7, window_bounds = array<i64: 3, 8>}, {pipeline_mode = #tpu.pipeline_mode<synchronous>, transform_indices = @transform_8, window_bounds = array<i64: 3, 1>}, {transform_indices = @transform_9, window_bounds = array<i64: 1, 3, 16>}]} {
    %c0 = arith.constant 0 : index
    %c0_0 = arith.constant 0 : index
    %0 = vector.load %arg3[%c0, %c0_0] : memref<32x32xf32, #tpu.memory_space<vmem>>, vector<32x32xf32>
    %c0_1 = arith.constant 0 : index
    %c0_2 = arith.constant 0 : index
    %c0_3 = arith.constant 0 : index
    %1 = vector.load %arg2[%c0_1, %c0_2, %c0_3] : memref<1x32x16xf32, #tpu.memory_space<vmem>>, vector<1x32x16xf32>
    %2 = vector.shape_cast %1 : vector<1x32x16xf32> to vector<32x16xf32>
    %cst = arith.constant dense<0.000000e+00> : vector<32x16xf32>
    %3 = tpu.matmul %0, %2, %cst {dimension_numbers = #tpu.dot_dimension_numbers<[1], [0], [0], [1], [0, 0, 1, 1], [], []>} : vector<32x32xf32>, vector<32x16xf32>, vector<32x16xf32> -> vector<32x16xf32>
    %c0_4 = arith.constant 0 : index
    %c0_5 = arith.constant 0 : index
    %4 = vector.load %arg4[%c0_4, %c0_5] : memref<32x1xf32, #tpu.memory_space<vmem>>, vector<32x1xf32>
    %5 = vector.broadcast %4 : vector<32x1xf32> to vector<32x16xf32>
    %6 = arith.addf %3, %5 : vector<32x16xf32>
    %cst_6 = arith.constant 0.000000e+00 : f32
    %7 = vector.broadcast %cst_6 : f32 to vector<32x16xf32>
    %8 = arith.maximumf %6, %7 : vector<32x16xf32>
    %c0_7 = arith.constant 0 : index
    %c0_8 = arith.constant 0 : index
    %9 = vector.load %arg5[%c0_7, %c0_8] : memref<16x32xf32, #tpu.memory_space<vmem>>, vector<16x32xf32>
    %cst_9 = arith.constant dense<0.000000e+00> : vector<16x16xf32>
    %10 = tpu.matmul %9, %8, %cst_9 {dimension_numbers = #tpu.dot_dimension_numbers<[1], [0], [0], [1], [0, 0, 1, 1], [], []>} : vector<16x32xf32>, vector<32x16xf32>, vector<16x16xf32> -> vector<16x16xf32>
    %c0_10 = arith.constant 0 : index
    %c0_11 = arith.constant 0 : index
    %11 = vector.load %arg6[%c0_10, %c0_11] : memref<16x1xf32, #tpu.memory_space<vmem>>, vector<16x1xf32>
    %12 = vector.broadcast %11 : vector<16x1xf32> to vector<16x16xf32>
    %13 = arith.addf %10, %12 : vector<16x16xf32>
    %cst_12 = arith.constant 0.000000e+00 : f32
    %14 = vector.broadcast %cst_12 : f32 to vector<16x16xf32>
    %15 = arith.maximumf %13, %14 : vector<16x16xf32>
    %c0_13 = arith.constant 0 : index
    %c0_14 = arith.constant 0 : index
    %16 = vector.load %arg7[%c0_13, %c0_14] : memref<8x16xf32, #tpu.memory_space<vmem>>, vector<8x16xf32>
    %cst_15 = arith.constant dense<0.000000e+00> : vector<8x16xf32>
    %17 = tpu.matmul %16, %15, %cst_15 {dimension_numbers = #tpu.dot_dimension_numbers<[1], [0], [0], [1], [0, 0, 1, 1], [], []>} : vector<8x16xf32>, vector<16x16xf32>, vector<8x16xf32> -> vector<8x16xf32>
    %c0_16 = arith.constant 0 : index
    %c0_17 = arith.constant 0 : index
    %18 = vector.load %arg8[%c0_16, %c0_17] : memref<8x1xf32, #tpu.memory_space<vmem>>, vector<8x1xf32>
    %19 = vector.broadcast %18 : vector<8x1xf32> to vector<8x16xf32>
    %20 = arith.addf %17, %19 : vector<8x16xf32>
    %cst_18 = arith.constant 0.000000e+00 : f32
    %21 = vector.broadcast %cst_18 : f32 to vector<8x16xf32>
    %22 = arith.maximumf %20, %21 : vector<8x16xf32>
    %c0_19 = arith.constant 0 : index
    %c0_20 = arith.constant 0 : index
    %23 = vector.load %arg9[%c0_19, %c0_20] : memref<3x8xf32, #tpu.memory_space<vmem>>, vector<3x8xf32>
    %cst_21 = arith.constant dense<0.000000e+00> : vector<3x16xf32>
    %24 = tpu.matmul %23, %22, %cst_21 {dimension_numbers = #tpu.dot_dimension_numbers<[1], [0], [0], [1], [0, 0, 1, 1], [], []>} : vector<3x8xf32>, vector<8x16xf32>, vector<3x16xf32> -> vector<3x16xf32>
    %c0_22 = arith.constant 0 : index
    %c0_23 = arith.constant 0 : index
    %25 = vector.load %arg10[%c0_22, %c0_23] : memref<3x1xf32, #tpu.memory_space<vmem>>, vector<3x1xf32>
    %26 = vector.broadcast %25 : vector<3x1xf32> to vector<3x16xf32>
    %27 = arith.addf %24, %26 : vector<3x16xf32>
    %28 = math.tanh %27 : vector<3x16xf32>
    %cst_24 = arith.constant 2.000000e+00 : f32
    %29 = vector.broadcast %cst_24 : f32 to vector<3x16xf32>
    %30 = arith.mulf %29, %28 : vector<3x16xf32>
    %c0_25 = arith.constant 0 : index
    %c0_26 = arith.constant 0 : index
    %c0_27 = arith.constant 0 : index
    %31 = vector.load %arg11[%c0_25, %c0_26, %c0_27] : memref<1x3x16xf32, #tpu.memory_space<vmem>>, vector<1x3x16xf32>
    %32 = vector.shape_cast %31 : vector<1x3x16xf32> to vector<3x16xf32>
    %33 = vector.shape_cast %30 : vector<3x16xf32> to vector<1x3x16xf32>
    tpu.vector_store %arg11[%c0_25, %c0_26, %c0_27], %33 {strides = array<i32>} : memref<1x3x16xf32, #tpu.memory_space<vmem>>, vector<1x3x16xf32>,
    return
  }
  func.func @transform_0(%arg0: i32, %arg1: i32) -> (i32, i32, i32) {
    %c0_i32 = arith.constant 0 : i32
    %c0_i32_0 = arith.constant 0 : i32
    return %arg0, %c0_i32, %arg1 : i32, i32, i32
  }
  func.func @transform_1(%arg0: i32, %arg1: i32) -> (i32, i32) {
    %c0_i32 = arith.constant 0 : i32
    %c0_i32_0 = arith.constant 0 : i32
    %c0_i32_1 = arith.constant 0 : i32
    return %c0_i32, %c0_i32_0 : i32, i32
  }
  func.func @transform_2(%arg0: i32, %arg1: i32) -> (i32, i32) {
    %c0_i32 = arith.constant 0 : i32
    %c0_i32_0 = arith.constant 0 : i32
    %c0_i32_1 = arith.constant 0 : i32
    return %c0_i32, %c0_i32_0 : i32, i32
  }
  func.func @transform_3(%arg0: i32, %arg1: i32) -> (i32, i32) {
    %c0_i32 = arith.constant 0 : i32
    %c0_i32_0 = arith.constant 0 : i32
    %c0_i32_1 = arith.constant 0 : i32
    return %c0_i32, %c0_i32_0 : i32, i32
  }
  func.func @transform_4(%arg0: i32, %arg1: i32) -> (i32, i32) {
    %c0_i32 = arith.constant 0 : i32
    %c0_i32_0 = arith.constant 0 : i32
    %c0_i32_1 = arith.constant 0 : i32
    return %c0_i32, %c0_i32_0 : i32, i32
  }
  func.func @transform_5(%arg0: i32, %arg1: i32) -> (i32, i32) {
    %c0_i32 = arith.constant 0 : i32
    %c0_i32_0 = arith.constant 0 : i32
    %c0_i32_1 = arith.constant 0 : i32
    return %c0_i32, %c0_i32_0 : i32, i32
  }
  func.func @transform_6(%arg0: i32, %arg1: i32) -> (i32, i32) {
    %c0_i32 = arith.constant 0 : i32
    %c0_i32_0 = arith.constant 0 : i32
    %c0_i32_1 = arith.constant 0 : i32
    return %c0_i32, %c0_i32_0 : i32, i32
  }
  func.func @transform_7(%arg0: i32, %arg1: i32) -> (i32, i32) {
    %c0_i32 = arith.constant 0 : i32
    %c0_i32_0 = arith.constant 0 : i32
    %c0_i32_1 = arith.constant 0 : i32
    return %c0_i32, %c0_i32_0 : i32, i32
  }
  func.func @transform_8(%arg0: i32, %arg1: i32) -> (i32, i32) {
    %c0_i32 = arith.constant 0 : i32
    %c0_i32_0 = arith.constant 0 : i32
    %c0_i32_1 = arith.constant 0 : i32
    return %c0_i32, %c0_i32_0 : i32, i32
  }
  func.func @transform_9(%arg0: i32, %arg1: i32) -> (i32, i32, i32) {
    %c0_i32 = arith.constant 0 : i32
    %c0_i32_0 = arith.constant 0 : i32
    return %arg0, %c0_i32, %arg1 : i32, i32, i32
  }
}

</mosaic_0001>

<llo_original>
// kernel: tpu_custom_call.1
$region0: #{tpu_custom_call.1}
  #allocation0 [shape = 'u32[]', space=smem, size = 0x4, offset = 0x4, fixed_abs, tag = 'smem constant byte address 0x4 - core index']
  #allocation1 [shape = 'u32[144,128]{1,0:T(1,128)}', space=vmem, size = 0x12000, scoped, tag = 'internal scratch']
  %s0 = inlined_call_operand.vmem [shape: f32[2,32,16], index: 0, kind: input, shape index: {}]
  %s1 = inlined_call_operand.vmem [shape: f32[32,32], index: 1, kind: input, shape index: {}]
  %s2 = inlined_call_operand.vmem [shape: f32[32,1], index: 2, kind: input, shape index: {}]
  %s3 = inlined_call_operand.vmem [shape: f32[16,32], index: 3, kind: input, shape index: {}]
  %s4 = inlined_call_operand.vmem [shape: f32[16,1], index: 4, kind: input, shape index: {}]
  %s5 = inlined_call_operand.vmem [shape: f32[8,16], index: 5, kind: input, shape index: {}]
  %s6 = inlined_call_operand.vmem [shape: f32[8,1], index: 6, kind: input, shape index: {}]
  %s7 = inlined_call_operand.vmem [shape: f32[3,8], index: 7, kind: input, shape index: {}]
  %s8 = inlined_call_operand.vmem [shape: f32[3,1], index: 8, kind: input, shape index: {}]
  %s9 = inlined_call_operand.vmem [shape: f32[2,3,16], index: 9, kind: output, shape index: {}]
  %s10 = sld [smem:[#allocation0]]
  $region69: #{tpu_custom_call.1} parent=0
    _
  %s12 = ssub.s32 1, %s10
  %s13 = scalar_select 0, %s12, %s10
  loop: start=0, step=1, limit=4
  $region2: #{tpu_custom_call.1} parent=0 // loop_pre_header
    _
  $region3: #{tpu_custom_call.1} parent=0 // loop_header
    %s15 = sphi 0, %s19
    %p16 = scmp.ge.s32.totalorder %s15, 4
    %s22 = sphi 0, %s34
    %s23 = sphi 0, %s30
    %s24 = sphi 0, %s22
    %s25 = sphi 0, %s23
    %s26 = sphi 0, %s24
    %s27 = sphi 0, %s25
    %s39 = sphi 0, %s41
    %s42 = sphi 0, %s39
    %s43 = sphi 0, %s42
    %s59 = sphi 0, %s43
    %s63 = sphi 0, %s63
    %s65 = sphi 0, %s63
    %s66 = sphi 0, %s65
    %s80 = sphi 0, %s66
    %s84 = sphi 0, %s84
    %s86 = sphi 0, %s84
    %s87 = sphi 0, %s86
    %s101 = sphi 0, %s87
    %s105 = sphi 0, %s105
    %s107 = sphi 0, %s105
    %s108 = sphi 0, %s107
    %s122 = sphi 0, %s108
    %s126 = sphi 0, %s126
    %s128 = sphi 0, %s126
    %s129 = sphi 0, %s128
    %s143 = sphi 0, %s129
    %s147 = sphi 0, %s147
    %s149 = sphi 0, %s147
    %s150 = sphi 0, %s149
    %s164 = sphi 0, %s150
    %s168 = sphi 0, %s168
    %s170 = sphi 0, %s168
    %s171 = sphi 0, %s170
    %s185 = sphi 0, %s171
    %s189 = sphi 0, %s189
    %s191 = sphi 0, %s189
    %s192 = sphi 0, %s191
    %s206 = sphi 0, %s192
    %s210 = sphi 0, %s210
    %s212 = sphi 0, %s210
    %s213 = sphi 0, %s212
    %s227 = sphi 0, %s213
    %s235 = sphi 0, %s237
    %s238 = sphi 0, %s235
    %s239 = sphi 0, %s238
    %s255 = sphi 0, %s239
  $region4: #{tpu_custom_call.1} parent=0 // loop_header_branch
    %18 = sbr.rel (%p16) target = $region8
  $region5: #{tpu_custom_call.1} parent=0 // loop_body
    %s20 = ssub.s32 %s15, 1
    %s21 = ssub.s32 %s15, 2
    %s28 = sadd.s32 1, %s23
    %p29 = scmp.ge.s32.totalorder %s28, 1
    %s30 = scalar_select %p29, 0, %s28
    %s31 = sadd.s32 1, %s22
    %s32 = scalar_select %p29, %s31, %s22
    %p33 = scmp.ge.s32.totalorder %s32, 2
    %s34 = scalar_select %p33, 0, %s32
    %s35 = ssub.s32 %s22, %s34
    %s36 = ssub.s32 %s23, %s30
    %s37 = sor.u32 %s35, %s36
    %p38 = scmp.eq.s32.totalorder %s37, 0
    %s40 = sadd.s32 %s39, 1
    %s41 = scalar_select %p38, %s39, %s40
    %p44 = pneg %p38
    %p45 = scmp.eq.s32.totalorder %s15, 1
    %p46 = por %p44, %p45
    %p47 = scmp.ne.s32.totalorder %s39, %s42
    %p48 = scmp.eq.s32.totalorder %s15, 0
    %p49 = por %p47, %p48
    %p50 = scmp.ne.s32.totalorder %s39, %s42
    %p51 = scmp.eq.s32.totalorder %s20, 1
    %p52 = por %p50, %p51
    %p53 = scmp.ne.s32.totalorder %s42, %s43
    %p54 = scmp.eq.s32.totalorder %s20, 0
    %p55 = por %p53, %p54
    %p56 = scmp.ne.s32.totalorder %s42, %s43
    %p57 = scmp.eq.s32.totalorder %s21, 1
    %p58 = por %p56, %p57
    %p60 = scmp.ne.s32.totalorder %s43, %s59
    %p61 = scmp.eq.s32.totalorder %s21, 0
    %p62 = por %p60, %p61
    %s64 = sadd.s32 %s63, 1
    %p67 = scmp.eq.s32.totalorder %s15, 1
    %p68 = scmp.ne.s32.totalorder %s63, %s65
    %p69 = scmp.eq.s32.totalorder %s15, 0
    %p70 = por %p68, %p69
    %p71 = scmp.ne.s32.totalorder %s63, %s65
    %p72 = scmp.eq.s32.totalorder %s20, 1
    %p73 = por %p71, %p72
    %p74 = scmp.ne.s32.totalorder %s65, %s66
    %p75 = scmp.eq.s32.totalorder %s20, 0
    %p76 = por %p74, %p75
    %p77 = scmp.ne.s32.totalorder %s65, %s66
    %p78 = scmp.eq.s32.totalorder %s21, 1
    %p79 = por %p77, %p78
    %p81 = scmp.ne.s32.totalorder %s66, %s80
    %p82 = scmp.eq.s32.totalorder %s21, 0
    %p83 = por %p81, %p82
    %s85 = sadd.s32 %s84, 1
    %p88 = scmp.eq.s32.totalorder %s15, 1
    %p89 = scmp.ne.s32.totalorder %s84, %s86
    %p90 = scmp.eq.s32.totalorder %s15, 0
    %p91 = por %p89, %p90
    %p92 = scmp.ne.s32.totalorder %s84, %s86
    %p93 = scmp.eq.s32.totalorder %s20, 1
    %p94 = por %p92, %p93
    %p95 = scmp.ne.s32.totalorder %s86, %s87
    %p96 = scmp.eq.s32.totalorder %s20, 0
    %p97 = por %p95, %p96
    %p98 = scmp.ne.s32.totalorder %s86, %s87
    %p99 = scmp.eq.s32.totalorder %s21, 1
    %p100 = por %p98, %p99
    %p102 = scmp.ne.s32.totalorder %s87, %s101
    %p103 = scmp.eq.s32.totalorder %s21, 0
    %p104 = por %p102, %p103
    %s106 = sadd.s32 %s105, 1
    %p109 = scmp.eq.s32.totalorder %s15, 1
    %p110 = scmp.ne.s32.totalorder %s105, %s107
    %p111 = scmp.eq.s32.totalorder %s15, 0
    %p112 = por %p110, %p111
    %p113 = scmp.ne.s32.totalorder %s105, %s107
    %p114 = scmp.eq.s32.totalorder %s20, 1
    %p115 = por %p113, %p114
    %p116 = scmp.ne.s32.totalorder %s107, %s108
    %p117 = scmp.eq.s32.totalorder %s20, 0
    %p118 = por %p116, %p117
    %p119 = scmp.ne.s32.totalorder %s107, %s108
    %p120 = scmp.eq.s32.totalorder %s21, 1
    %p121 = por %p119, %p120
    %p123 = scmp.ne.s32.totalorder %s108, %s122
    %p124 = scmp.eq.s32.totalorder %s21, 0
    %p125 = por %p123, %p124
    %s127 = sadd.s32 %s126, 1
    %p130 = scmp.eq.s32.totalorder %s15, 1
    %p131 = scmp.ne.s32.totalorder %s126, %s128
    %p132 = scmp.eq.s32.totalorder %s15, 0
    %p133 = por %p131, %p132
    %p134 = scmp.ne.s32.totalorder %s126, %s128
    %p135 = scmp.eq.s32.totalorder %s20, 1
    %p136 = por %p134, %p135
    %p137 = scmp.ne.s32.totalorder %s128, %s129
    %p138 = scmp.eq.s32.totalorder %s20, 0
    %p139 = por %p137, %p138
    %p140 = scmp.ne.s32.totalorder %s128, %s129
    %p141 = scmp.eq.s32.totalorder %s21, 1
    %p142 = por %p140, %p141
    %p144 = scmp.ne.s32.totalorder %s129, %s143
    %p145 = scmp.eq.s32.totalorder %s21, 0
    %p146 = por %p144, %p145
    %s148 = sadd.s32 %s147, 1
    %p151 = scmp.eq.s32.totalorder %s15, 1
    %p152 = scmp.ne.s32.totalorder %s147, %s149
    %p153 = scmp.eq.s32.totalorder %s15, 0
    %p154 = por %p152, %p153
    %p155 = scmp.ne.s32.totalorder %s147, %s149
    %p156 = scmp.eq.s32.totalorder %s20, 1
    %p157 = por %p155, %p156
    %p158 = scmp.ne.s32.totalorder %s149, %s150
    %p159 = scmp.eq.s32.totalorder %s20, 0
    %p160 = por %p158, %p159
    %p161 = scmp.ne.s32.totalorder %s149, %s150
    %p162 = scmp.eq.s32.totalorder %s21, 1
    %p163 = por %p161, %p162
    %p165 = scmp.ne.s32.totalorder %s150, %s164
    %p166 = scmp.eq.s32.totalorder %s21, 0
    %p167 = por %p165, %p166
    %s169 = sadd.s32 %s168, 1
    %p172 = scmp.eq.s32.totalorder %s15, 1
    %p173 = scmp.ne.s32.totalorder %s168, %s170
    %p174 = scmp.eq.s32.totalorder %s15, 0
    %p175 = por %p173, %p174
    %p176 = scmp.ne.s32.totalorder %s168, %s170
    %p177 = scmp.eq.s32.totalorder %s20, 1
    %p178 = por %p176, %p177
    %p179 = scmp.ne.s32.totalorder %s170, %s171
    %p180 = scmp.eq.s32.totalorder %s20, 0
    %p181 = por %p179, %p180
    %p182 = scmp.ne.s32.totalorder %s170, %s171
    %p183 = scmp.eq.s32.totalorder %s21, 1
    %p184 = por %p182, %p183
    %p186 = scmp.ne.s32.totalorder %s171, %s185
    %p187 = scmp.eq.s32.totalorder %s21, 0
    %p188 = por %p186, %p187
    %s190 = sadd.s32 %s189, 1
    %p193 = scmp.eq.s32.totalorder %s15, 1
    %p194 = scmp.ne.s32.totalorder %s189, %s191
    %p195 = scmp.eq.s32.totalorder %s15, 0
    %p196 = por %p194, %p195
    %p197 = scmp.ne.s32.totalorder %s189, %s191
    %p198 = scmp.eq.s32.totalorder %s20, 1
    %p199 = por %p197, %p198
    %p200 = scmp.ne.s32.totalorder %s191, %s192
    %p201 = scmp.eq.s32.totalorder %s20, 0
    %p202 = por %p200, %p201
    %p203 = scmp.ne.s32.totalorder %s191, %s192
    %p204 = scmp.eq.s32.totalorder %s21, 1
    %p205 = por %p203, %p204
    %p207 = scmp.ne.s32.totalorder %s192, %s206
    %p208 = scmp.eq.s32.totalorder %s21, 0
    %p209 = por %p207, %p208
    %s211 = sadd.s32 %s210, 1
    %p214 = scmp.eq.s32.totalorder %s15, 1
    %p215 = scmp.ne.s32.totalorder %s210, %s212
    %p216 = scmp.eq.s32.totalorder %s15, 0
    %p217 = por %p215, %p216
    %p218 = scmp.ne.s32.totalorder %s210, %s212
    %p219 = scmp.eq.s32.totalorder %s20, 1
    %p220 = por %p218, %p219
    %p221 = scmp.ne.s32.totalorder %s212, %s213
    %p222 = scmp.eq.s32.totalorder %s20, 0
    %p223 = por %p221, %p222
    %p224 = scmp.ne.s32.totalorder %s212, %s213
    %p225 = scmp.eq.s32.totalorder %s21, 1
    %p226 = por %p224, %p225
    %p228 = scmp.ne.s32.totalorder %s213, %s227
    %p229 = scmp.eq.s32.totalorder %s21, 0
    %p230 = por %p228, %p229
    %s231 = ssub.s32 %s22, %s34
    %s232 = ssub.s32 %s23, %s30
    %s233 = sor.u32 %s231, %s232
    %p234 = scmp.eq.s32.totalorder %s233, 0
    %s236 = sadd.s32 %s235, 1
    %s237 = scalar_select %p234, %s235, %s236
    %p240 = pneg %p234
    %p241 = scmp.eq.s32.totalorder %s15, 1
    %p242 = por %p240, %p241
    %p243 = scmp.ne.s32.totalorder %s235, %s238
    %p244 = scmp.eq.s32.totalorder %s15, 0
    %p245 = por %p243, %p244
    %p246 = scmp.ne.s32.totalorder %s235, %s238
    %p247 = scmp.eq.s32.totalorder %s20, 1
    %p248 = por %p246, %p247
    %p249 = scmp.ne.s32.totalorder %s238, %s239
    %p250 = scmp.eq.s32.totalorder %s20, 0
    %p251 = por %p249, %p250
    %p252 = scmp.ne.s32.totalorder %s238, %s239
    %p253 = scmp.eq.s32.totalorder %s21, 1
    %p254 = por %p252, %p253
    %p256 = scmp.ne.s32.totalorder %s239, %s255
    %p257 = scmp.eq.s32.totalorder %s21, 0
    %p258 = por %p256, %p257
    %p259 = scmp.le.s32.totalorder 1, %s15
    %p260 = scmp.lt.s32.totalorder %s15, 3
    %p261 = pnand %p259, %p260
    %p262 = pneg %p261
    // Predicated region
    $region9: #{tpu_custom_call.1} parent=5 // pred_check
      _
    $region10: #{tpu_custom_call.1} parent=5 // pred_check_branch
      %264 = sbr.rel (%p261) target = $region12
    $region11: #{tpu_custom_call.1} parent=5 // pred_region
      %s265 = ssub.s32 %s15, 1
      // Predicated region
      $region13: #{tpu_custom_call.1} parent=11 // pred_check
        %p266 = pneg %p76
      $region14: #{tpu_custom_call.1} parent=11 // pred_check_branch
        %268 = sbr.rel (%p266) target = $region16
      $region15: #{tpu_custom_call.1} parent=11 // pred_region
        _
      $region16: #{tpu_custom_call.1} parent=11 // pred_fallthru
        _
      // Predicated region
      $region17: #{tpu_custom_call.1} parent=11 // pred_check
        %p269 = pneg %p97
      $region18: #{tpu_custom_call.1} parent=11 // pred_check_branch
        %271 = sbr.rel (%p269) target = $region20
      $region19: #{tpu_custom_call.1} parent=11 // pred_region
        _
      $region20: #{tpu_custom_call.1} parent=11 // pred_fallthru
        _
      // Predicated region
      $region21: #{tpu_custom_call.1} parent=11 // pred_check
        %p272 = pneg %p118
      $region22: #{tpu_custom_call.1} parent=11 // pred_check_branch
        %274 = sbr.rel (%p272) target = $region24
      $region23: #{tpu_custom_call.1} parent=11 // pred_region
        _
      $region24: #{tpu_custom_call.1} parent=11 // pred_fallthru
        _
      // Predicated region
      $region25: #{tpu_custom_call.1} parent=11 // pred_check
        %p275 = pneg %p139
      $region26: #{tpu_custom_call.1} parent=11 // pred_check_branch
        %277 = sbr.rel (%p275) target = $region28
      $region27: #{tpu_custom_call.1} parent=11 // pred_region
        _
      $region28: #{tpu_custom_call.1} parent=11 // pred_fallthru
        _
      // Predicated region
      $region29: #{tpu_custom_call.1} parent=11 // pred_check
        %p278 = pneg %p160
      $region30: #{tpu_custom_call.1} parent=11 // pred_check_branch
        %280 = sbr.rel (%p278) target = $region32
      $region31: #{tpu_custom_call.1} parent=11 // pred_region
        _
      $region32: #{tpu_custom_call.1} parent=11 // pred_fallthru
        _
      // Predicated region
      $region33: #{tpu_custom_call.1} parent=11 // pred_check
        %p281 = pneg %p181
      $region34: #{tpu_custom_call.1} parent=11 // pred_check_branch
        %283 = sbr.rel (%p281) target = $region36
      $region35: #{tpu_custom_call.1} parent=11 // pred_region
        _
      $region36: #{tpu_custom_call.1} parent=11 // pred_fallthru
        _
      // Predicated region
      $region37: #{tpu_custom_call.1} parent=11 // pred_check
        %p284 = pneg %p202
      $region38: #{tpu_custom_call.1} parent=11 // pred_check_branch
        %286 = sbr.rel (%p284) target = $region40
      $region39: #{tpu_custom_call.1} parent=11 // pred_region
        _
      $region40: #{tpu_custom_call.1} parent=11 // pred_fallthru
        _
      // Predicated region
      $region41: #{tpu_custom_call.1} parent=11 // pred_check
        %p287 = pneg %p223
      $region42: #{tpu_custom_call.1} parent=11 // pred_check_branch
        %289 = sbr.rel (%p287) target = $region44
      $region43: #{tpu_custom_call.1} parent=11 // pred_region
        _
      $region44: #{tpu_custom_call.1} parent=11 // pred_fallthru
        _
    $region12: #{tpu_custom_call.1} parent=5 // pred_fallthru
      _
    %p290 = scmp.lt.s32.totalorder %s15, 2
    // Predicated region
    $region45: #{tpu_custom_call.1} parent=5 // pred_check
      %p291 = pneg %p290
    $region46: #{tpu_custom_call.1} parent=5 // pred_check_branch
      %293 = sbr.rel (%p291) target = $region48
    $region47: #{tpu_custom_call.1} parent=5 // pred_region
      // Predicated region
      $region49: #{tpu_custom_call.1} parent=47 // pred_check
        %p294 = pneg %p49
      $region50: #{tpu_custom_call.1} parent=47 // pred_check_branch
        %296 = sbr.rel (%p294) target = $region52
      $region51: #{tpu_custom_call.1} parent=47 // pred_region
        %p297 = scmp.lt.s32.totalorder %s22, 1
        %s298 = scalar_select %p297, %s22, 1
        %p299 = scmp.lt.s32.totalorder %s23, 0
        %s300 = scalar_select %p299, %s23, 0
        %s301 = smul.addr %s298, 4
        %s302 = sadd.s32 %s300, %s301
        %s303 = smul.addr %s302, 8
        %s304 = scalar_lea.vmem %s0, %s303
      $region52: #{tpu_custom_call.1} parent=47 // pred_fallthru
        _
    $region48: #{tpu_custom_call.1} parent=5 // pred_fallthru
      _
    %p305 = scmp.le.s32.totalorder 1, %s15
    %p306 = scmp.lt.s32.totalorder %s15, 3
    %p307 = pnand %p305, %p306
    %p308 = pneg %p307
    // Predicated region
    $region53: #{tpu_custom_call.1} parent=5 // pred_check
      _
    $region54: #{tpu_custom_call.1} parent=5 // pred_check_branch
      %310 = sbr.rel (%p307) target = $region56
    $region55: #{tpu_custom_call.1} parent=5 // pred_region
      %s311 = ssub.s32 %s15, 1
      %p312 = scmp.lt.s32.totalorder %s24, 1
      %s313 = scalar_select %p312, %s24, 1
      %p314 = scmp.lt.s32.totalorder %s25, 0
      %s315 = scalar_select %p314, %s25, 0
      %s316 = smul.addr %s313, 4
      %s317 = sadd.s32 %s315, %s316
      %s318 = smul.addr %s317, 8
      %s319 = scalar_lea.vmem %s0, %s318
      %p320 = pneg %p55
      %p321 = pneg %p52
      %p322 = pneg %p76
      %p323 = pneg %p73
      %p324 = pneg %p97
      %p325 = pneg %p94
      %p326 = pneg %p118
      %p327 = pneg %p115
      %p328 = pneg %p139
      %p329 = pneg %p136
      %p330 = pneg %p160
      %p331 = pneg %p157
      %p332 = pneg %p181
      %p333 = pneg %p178
      %p334 = pneg %p202
      %p335 = pneg %p199
      %p336 = pneg %p223
      %p337 = pneg %p220
      %p338 = pneg %p251
      %p339 = pneg %p248
      %p340 = scmp.lt.s32.totalorder %s24, 1
      %s341 = scalar_select %p340, %s24, 1
      %p342 = scmp.lt.s32.totalorder %s25, 0
      %s343 = scalar_select %p342, %s25, 0
      %s344 = sadd.s32 %s343, %s341
      %s345 = smul.addr %s344, 4
      %s346 = scalar_lea.vmem %s9, %s345
      %p347 = scmp.lt.s32.totalorder %s24, 1
      %s348 = scalar_select %p347, %s24, 1
      %p349 = scmp.lt.s32.totalorder %s25, 0
      %s350 = scalar_select %p349, %s25, 0
      %s351 = smul.addr %s348, 4
      %s352 = sadd.s32 %s350, %s351
      %s353 = smul.addr %s352, 8
      %s354 = scalar_lea.vmem %s0, %s353
      %p355 = scmp.lt.s32.totalorder %s24, 1
      %s356 = scalar_select %p355, %s24, 1
      %p357 = scmp.lt.s32.totalorder %s25, 0
      %s358 = scalar_select %p357, %s25, 0
      %s359 = sadd.s32 %s358, %s356
      %s360 = smul.addr %s359, 4
      %s361 = scalar_lea.vmem %s9, %s360
      %v362 = vld [vmem:[%s1] sm:$0xff]
      %v363 = vld [vmem:[%s1 + $0x8] sm:$0xff]
      %v364 = vld [vmem:[%s1 + $0x10] sm:$0xff]
      %v365 = vld [vmem:[%s1 + $0x18] sm:$0xff]
      %v366 = vld [vmem:[%s354] sm:$0xff]
      %v367 = vld [vmem:[%s354 + $0x8] sm:$0xff]
      %v368 = vld [vmem:[%s354 + $0x10] sm:$0xff]
      %v369 = vld [vmem:[%s354 + $0x18] sm:$0xff]
      %v370 = vld [vmem:[%s2] sm:$0xff]
      %v371 = vld [vmem:[%s2 + $0x8] sm:$0xff]
      %v372 = vld [vmem:[%s2 + $0x10] sm:$0xff]
      %v373 = vld [vmem:[%s2 + $0x18] sm:$0xff]
      %375 = vset.pattern.permute.xlu0 0
      %376 = vperm.xlu0 %375, %v370
      %v377 = vpop.permute.xlu0 %376
      %380 = vset.pattern.permute.xlu0 0
      %381 = vperm.xlu0 %380, %v371
      %v382 = vpop.permute.xlu0 %381
      %385 = vset.pattern.permute.xlu0 0
      %386 = vperm.xlu0 %385, %v372
      %v387 = vpop.permute.xlu0 %386
      %390 = vset.pattern.permute.xlu0 0
      %391 = vperm.xlu0 %390, %v373
      %v392 = vpop.permute.xlu0 %391
      %vm394 = vcmask 261120
      %v396 = vsel %vm394, %v362, 0
      %v399 = vsel %vm394, %v363, 0
      %v402 = vsel %vm394, %v364, 0
      %v405 = vsel %vm394, %v365, 0
      %407 = vmatprep.subr.mxu0 0.0
      %408 = vmatpush1.msra.mxu0 %v366
      %409 = vmatprep.subr.mxu0 0.0
      %410 = vmatpush1.msra.mxu0 %v367
      %411 = vmatprep.subr.mxu0 0.0
      %412 = vmatpush1.msra.mxu0 %v368
      %413 = vmatprep.subr.mxu0 0.0
      %414 = vmatpush1.msra.mxu0 %v369
      %415 = vmatprep.subr.mxu0 0.0
      %416 = vmatpush1.msra.mxu0 0.0
      %417 = vmatprep.subr.mxu0 0.0
      %418 = vmatpush1.msra.mxu0 0.0
      %419 = vmatprep.subr.mxu0 0.0
      %420 = vmatpush1.msra.mxu0 0.0
      %421 = vmatprep.subr.mxu0 0.0
      %422 = vmatpush1.msra.mxu0 0.0
      %423 = vmatprep.subr.mxu0 0.0
      %424 = vmatpush1.msra.mxu0 0.0
      %425 = vmatprep.subr.mxu0 0.0
      %426 = vmatpush1.msra.mxu0 0.0
      %427 = vmatprep.subr.mxu0 0.0
      %428 = vmatpush1.msra.mxu0 0.0
      %429 = vmatprep.subr.mxu0 0.0
      %430 = vmatpush1.msra.mxu0 0.0
      %431 = vmatprep.subr.mxu0 0.0
      %432 = vmatpush1.msra.mxu0 0.0
      %433 = vmatprep.subr.mxu0 0.0
      %434 = vmatpush1.msra.mxu0 0.0
      %435 = vmatprep.subr.mxu0 0.0
      %436 = vmatpush1.msra.mxu0 0.0
      %437 = vmatprep.subr.mxu0 0.0
      %438 = vmatpush1.msra.mxu0 0.0
      %439 = vmatprep.subr.mxu0 0.0
      %440 = vmatpush1.msra.mxu0 0.0
      %441 = vmatprep.subr.mxu0 0.0
      %442 = vmatpush1.msra.mxu0 0.0
      %443 = vmatprep.subr.mxu0 0.0
      %444 = vmatpush1.msra.mxu0 0.0
      %445 = vmatprep.subr.mxu0 0.0
      %446 = vmatpush1.msra.mxu0 0.0
      %447 = vmatprep.subr.mxu0 0.0
      %448 = vmatpush1.msra.mxu0 0.0
      %449 = vmatprep.subr.mxu0 0.0
      %450 = vmatpush1.msra.mxu0 0.0
      %451 = vmatprep.subr.mxu0 0.0
      %452 = vmatpush1.msra.mxu0 0.0
      %453 = vmatprep.subr.mxu0 0.0
      %454 = vmatpush1.msra.mxu0 0.0
      %455 = vmatprep.subr.mxu0 0.0
      %456 = vmatpush1.msra.mxu0 0.0
      %457 = vmatprep.subr.mxu0 0.0
      %458 = vmatpush1.msra.mxu0 0.0
      %459 = vmatprep.subr.mxu0 0.0
      %460 = vmatpush1.msra.mxu0 0.0
      %461 = vmatprep.subr.mxu0 0.0
      %462 = vmatpush1.msra.mxu0 0.0
      %463 = vmatprep.subr.mxu0 0.0
      %464 = vmatpush1.msra.mxu0 0.0
      %465 = vmatprep.subr.mxu0 0.0
      %466 = vmatpush1.msra.mxu0 0.0
      %467 = vmatprep.subr.mxu0 0.0
      %468 = vmatpush1.msra.mxu0 0.0
      %469 = vmatprep.subr.mxu0 0.0
      %470 = vmatpush1.msra.mxu0 0.0
      %471 = vmatprep.mubr.f32.mxu0 0.0
      %472 = vmatmul.mubr.f32.gmra.mrb[0].mxu0 %v396
      %v473 = vpop.f32.mrb[0].mxu0
      %v474 = vadd.f32 %v377, %v473
      %v475 = vpop.f32.mrb[0].mxu0
      %476 = vmatprep.mubr.f32.mxu0 0.0
      %477 = vmatmul.mubr.f32.gmra.mrb[0].mxu0 %v399
      %v478 = vpop.f32.mrb[0].mxu0
      %v479 = vadd.f32 %v382, %v478
      %v480 = vpop.f32.mrb[0].mxu0
      %481 = vmatprep.mubr.f32.mxu0 0.0
      %482 = vmatmul.mubr.f32.gmra.mrb[0].mxu0 %v402
      %v483 = vpop.f32.mrb[0].mxu0
      %v484 = vadd.f32 %v387, %v483
      %v485 = vpop.f32.mrb[0].mxu0
      %486 = vmatprep.mubr.f32.mxu0 0.0
      %487 = vmatmul.mubr.f32.gmra.mrb[0].mxu0 %v405
      %v488 = vpop.f32.mrb[0].mxu0
      %v489 = vadd.f32 %v392, %v488
      %v490 = vpop.f32.mrb[0].mxu0
      %491 = vdwg.mxu0
      %v492 = vmax.f32 %v474, 0.0
      %v493 = vmax.f32 %v479, 0.0
      %v494 = vmax.f32 %v484, 0.0
      %v495 = vmax.f32 %v489, 0.0
      %v496 = vld [vmem:[%s3] sm:$0xff]
      %v497 = vld [vmem:[%s3 + $0x8] sm:$0xff]
      %v498 = vld [vmem:[%s4] sm:$0xff]
      %v499 = vld [vmem:[%s4 + $0x8] sm:$0xff]
      %501 = vset.pattern.permute.xlu0 0
      %502 = vperm.xlu0 %501, %v498
      %v503 = vpop.permute.xlu0 %502
      %506 = vset.pattern.permute.xlu0 0
      %507 = vperm.xlu0 %506, %v499
      %v508 = vpop.permute.xlu0 %507
      %v511 = vsel %vm394, %v496, 0
      %v514 = vsel %vm394, %v497, 0
      %516 = vmatprep.subr.mxu0 0.0
      %517 = vmatpush1.msra.mxu0 %v492
      %518 = vmatprep.subr.mxu0 0.0
      %519 = vmatpush1.msra.mxu0 %v493
      %520 = vmatprep.subr.mxu0 0.0
      %521 = vmatpush1.msra.mxu0 %v494
      %522 = vmatprep.subr.mxu0 0.0
      %523 = vmatpush1.msra.mxu0 %v495
      %524 = vmatprep.subr.mxu0 0.0
      %525 = vmatpush1.msra.mxu0 0.0
      %526 = vmatprep.subr.mxu0 0.0
      %527 = vmatpush1.msra.mxu0 0.0
      %528 = vmatprep.subr.mxu0 0.0
      %529 = vmatpush1.msra.mxu0 0.0
      %530 = vmatprep.subr.mxu0 0.0
      %531 = vmatpush1.msra.mxu0 0.0
      %532 = vmatprep.subr.mxu0 0.0
      %533 = vmatpush1.msra.mxu0 0.0
      %534 = vmatprep.subr.mxu0 0.0
      %535 = vmatpush1.msra.mxu0 0.0
      %536 = vmatprep.subr.mxu0 0.0
      %537 = vmatpush1.msra.mxu0 0.0
      %538 = vmatprep.subr.mxu0 0.0
      %539 = vmatpush1.msra.mxu0 0.0
      %540 = vmatprep.subr.mxu0 0.0
      %541 = vmatpush1.msra.mxu0 0.0
      %542 = vmatprep.subr.mxu0 0.0
      %543 = vmatpush1.msra.mxu0 0.0
      %544 = vmatprep.subr.mxu0 0.0
      %545 = vmatpush1.msra.mxu0 0.0
      %546 = vmatprep.subr.mxu0 0.0
      %547 = vmatpush1.msra.mxu0 0.0
      %548 = vmatprep.subr.mxu0 0.0
      %549 = vmatpush1.msra.mxu0 0.0
      %550 = vmatprep.subr.mxu0 0.0
      %551 = vmatpush1.msra.mxu0 0.0
      %552 = vmatprep.subr.mxu0 0.0
      %553 = vmatpush1.msra.mxu0 0.0
      %554 = vmatprep.subr.mxu0 0.0
      %555 = vmatpush1.msra.mxu0 0.0
      %556 = vmatprep.subr.mxu0 0.0
      %557 = vmatpush1.msra.mxu0 0.0
      %558 = vmatprep.subr.mxu0 0.0
      %559 = vmatpush1.msra.mxu0 0.0
      %560 = vmatprep.subr.mxu0 0.0
      %561 = vmatpush1.msra.mxu0 0.0
      %562 = vmatprep.subr.mxu0 0.0
      %563 = vmatpush1.msra.mxu0 0.0
      %564 = vmatprep.subr.mxu0 0.0
      %565 = vmatpush1.msra.mxu0 0.0
      %566 = vmatprep.subr.mxu0 0.0
      %567 = vmatpush1.msra.mxu0 0.0
      %568 = vmatprep.subr.mxu0 0.0
      %569 = vmatpush1.msra.mxu0 0.0
      %570 = vmatprep.subr.mxu0 0.0
      %571 = vmatpush1.msra.mxu0 0.0
      %572 = vmatprep.subr.mxu0 0.0
      %573 = vmatpush1.msra.mxu0 0.0
      %574 = vmatprep.subr.mxu0 0.0
      %575 = vmatpush1.msra.mxu0 0.0
      %576 = vmatprep.subr.mxu0 0.0
      %577 = vmatpush1.msra.mxu0 0.0
      %578 = vmatprep.subr.mxu0 0.0
      %579 = vmatpush1.msra.mxu0 0.0
      %580 = vmatprep.mubr.f32.mxu0 0.0
      %581 = vmatmul.mubr.f32.gmra.mrb[0].mxu0 %v511
      %v582 = vpop.f32.mrb[0].mxu0
      %v583 = vadd.f32 %v503, %v582
      %v584 = vpop.f32.mrb[0].mxu0
      %585 = vmatprep.mubr.f32.mxu0 0.0
      %586 = vmatmul.mubr.f32.gmra.mrb[0].mxu0 %v514
      %v587 = vpop.f32.mrb[0].mxu0
      %v588 = vadd.f32 %v508, %v587
      %v589 = vpop.f32.mrb[0].mxu0
      %590 = vdwg.mxu0
      %v591 = vmax.f32 %v583, 0.0
      %v592 = vmax.f32 %v588, 0.0
      %v593 = vld [vmem:[%s5] sm:$0xff]
      %v594 = vld [vmem:[%s6] sm:$0xff]
      %596 = vset.pattern.permute.xlu0 0
      %597 = vperm.xlu0 %596, %v594
      %v598 = vpop.permute.xlu0 %597
      %vm600 = vcmask 130048
      %v602 = vsel %vm600, %v593, 0
      %604 = vmatprep.subr.mxu0 0.0
      %605 = vmatpush1.msra.mxu0 %v591
      %606 = vmatprep.subr.mxu0 0.0
      %607 = vmatpush1.msra.mxu0 %v592
      %608 = vmatprep.subr.mxu0 0.0
      %609 = vmatpush1.msra.mxu0 0.0
      %610 = vmatprep.subr.mxu0 0.0
      %611 = vmatpush1.msra.mxu0 0.0
      %612 = vmatprep.subr.mxu0 0.0
      %613 = vmatpush1.msra.mxu0 0.0
      %614 = vmatprep.subr.mxu0 0.0
      %615 = vmatpush1.msra.mxu0 0.0
      %616 = vmatprep.subr.mxu0 0.0
      %617 = vmatpush1.msra.mxu0 0.0
      %618 = vmatprep.subr.mxu0 0.0
      %619 = vmatpush1.msra.mxu0 0.0
      %620 = vmatprep.subr.mxu0 0.0
      %621 = vmatpush1.msra.mxu0 0.0
      %622 = vmatprep.subr.mxu0 0.0
      %623 = vmatpush1.msra.mxu0 0.0
      %624 = vmatprep.subr.mxu0 0.0
      %625 = vmatpush1.msra.mxu0 0.0
      %626 = vmatprep.subr.mxu0 0.0
      %627 = vmatpush1.msra.mxu0 0.0
      %628 = vmatprep.subr.mxu0 0.0
      %629 = vmatpush1.msra.mxu0 0.0
      %630 = vmatprep.subr.mxu0 0.0
      %631 = vmatpush1.msra.mxu0 0.0
      %632 = vmatprep.subr.mxu0 0.0
      %633 = vmatpush1.msra.mxu0 0.0
      %634 = vmatprep.subr.mxu0 0.0
      %635 = vmatpush1.msra.mxu0 0.0
      %636 = vmatprep.subr.mxu0 0.0
      %637 = vmatpush1.msra.mxu0 0.0
      %638 = vmatprep.subr.mxu0 0.0
      %639 = vmatpush1.msra.mxu0 0.0
      %640 = vmatprep.subr.mxu0 0.0
      %641 = vmatpush1.msra.mxu0 0.0
      %642 = vmatprep.subr.mxu0 0.0
      %643 = vmatpush1.msra.mxu0 0.0
      %644 = vmatprep.subr.mxu0 0.0
      %645 = vmatpush1.msra.mxu0 0.0
      %646 = vmatprep.subr.mxu0 0.0
      %647 = vmatpush1.msra.mxu0 0.0
      %648 = vmatprep.subr.mxu0 0.0
      %649 = vmatpush1.msra.mxu0 0.0
      %650 = vmatprep.subr.mxu0 0.0
      %651 = vmatpush1.msra.mxu0 0.0
      %652 = vmatprep.subr.mxu0 0.0
      %653 = vmatpush1.msra.mxu0 0.0
      %654 = vmatprep.subr.mxu0 0.0
      %655 = vmatpush1.msra.mxu0 0.0
      %656 = vmatprep.subr.mxu0 0.0
      %657 = vmatpush1.msra.mxu0 0.0
      %658 = vmatprep.subr.mxu0 0.0
      %659 = vmatpush1.msra.mxu0 0.0
      %660 = vmatprep.subr.mxu0 0.0
      %661 = vmatpush1.msra.mxu0 0.0
      %662 = vmatprep.subr.mxu0 0.0
      %663 = vmatpush1.msra.mxu0 0.0
      %664 = vmatprep.subr.mxu0 0.0
      %665 = vmatpush1.msra.mxu0 0.0
      %666 = vmatprep.subr.mxu0 0.0
      %667 = vmatpush1.msra.mxu0 0.0
      %668 = vmatprep.mubr.f32.mxu0 0.0
      %669 = vmatmul.mubr.f32.gmra.mrb[0].mxu0 %v602
      %v670 = vpop.f32.mrb[0].mxu0
      %v671 = vadd.f32 %v598, %v670
      %v672 = vpop.f32.mrb[0].mxu0
      %673 = vdwg.mxu0
      %v674 = vmax.f32 %v671, 0.0
      %v675 = vld [vmem:[%s7] sm:$0x7]
      %v676 = vld [vmem:[%s8] sm:$0x7]
      %678 = vset.pattern.permute.xlu0 0
      %679 = vperm.xlu0 %678, %v676
      %v680 = vpop.permute.xlu0 %679
      %vm682 = vcmask 64512
      %v684 = vsel %vm682, %v675, 0
      %686 = vmatprep.subr.mxu0 0.0
      %687 = vmatpush1.msra.mxu0 %v674
      %688 = vmatprep.subr.mxu0 0.0
      %689 = vmatpush1.msra.mxu0 0.0
      %690 = vmatprep.subr.mxu0 0.0
      %691 = vmatpush1.msra.mxu0 0.0
      %692 = vmatprep.subr.mxu0 0.0
      %693 = vmatpush1.msra.mxu0 0.0
      %694 = vmatprep.subr.mxu0 0.0
      %695 = vmatpush1.msra.mxu0 0.0
      %696 = vmatprep.subr.mxu0 0.0
      %697 = vmatpush1.msra.mxu0 0.0
      %698 = vmatprep.subr.mxu0 0.0
      %699 = vmatpush1.msra.mxu0 0.0
      %700 = vmatprep.subr.mxu0 0.0
      %701 = vmatpush1.msra.mxu0 0.0
      %702 = vmatprep.subr.mxu0 0.0
      %703 = vmatpush1.msra.mxu0 0.0
      %704 = vmatprep.subr.mxu0 0.0
      %705 = vmatpush1.msra.mxu0 0.0
      %706 = vmatprep.subr.mxu0 0.0
      %707 = vmatpush1.msra.mxu0 0.0
      %708 = vmatprep.subr.mxu0 0.0
      %709 = vmatpush1.msra.mxu0 0.0
      %710 = vmatprep.subr.mxu0 0.0
      %711 = vmatpush1.msra.mxu0 0.0
      %712 = vmatprep.subr.mxu0 0.0
      %713 = vmatpush1.msra.mxu0 0.0
      %714 = vmatprep.subr.mxu0 0.0
      %715 = vmatpush1.msra.mxu0 0.0
      %716 = vmatprep.subr.mxu0 0.0
      %717 = vmatpush1.msra.mxu0 0.0
      %718 = vmatprep.subr.mxu0 0.0
      %719 = vmatpush1.msra.mxu0 0.0
      %720 = vmatprep.subr.mxu0 0.0
      %721 = vmatpush1.msra.mxu0 0.0
      %722 = vmatprep.subr.mxu0 0.0
      %723 = vmatpush1.msra.mxu0 0.0
      %724 = vmatprep.subr.mxu0 0.0
      %725 = vmatpush1.msra.mxu0 0.0
      %726 = vmatprep.subr.mxu0 0.0
      %727 = vmatpush1.msra.mxu0 0.0
      %728 = vmatprep.subr.mxu0 0.0
      %729 = vmatpush1.msra.mxu0 0.0
      %730 = vmatprep.subr.mxu0 0.0
      %731 = vmatpush1.msra.mxu0 0.0
      %732 = vmatprep.subr.mxu0 0.0
      %733 = vmatpush1.msra.mxu0 0.0
      %734 = vmatprep.subr.mxu0 0.0
      %735 = vmatpush1.msra.mxu0 0.0
      %736 = vmatprep.subr.mxu0 0.0
      %737 = vmatpush1.msra.mxu0 0.0
      %738 = vmatprep.subr.mxu0 0.0
      %739 = vmatpush1.msra.mxu0 0.0
      %740 = vmatprep.subr.mxu0 0.0
      %741 = vmatpush1.msra.mxu0 0.0
      %742 = vmatprep.subr.mxu0 0.0
      %743 = vmatpush1.msra.mxu0 0.0
      %744 = vmatprep.subr.mxu0 0.0
      %745 = vmatpush1.msra.mxu0 0.0
      %746 = vmatprep.subr.mxu0 0.0
      %747 = vmatpush1.msra.mxu0 0.0
      %748 = vmatprep.subr.mxu0 0.0
      %749 = vmatpush1.msra.mxu0 0.0
      %750 = vmatprep.mubr.f32.mxu0 0.0
      %751 = vmatmul.mubr.f32.gmra.mrb[0].mxu0 %v684
      %v752 = vpop.f32.mrb[0].mxu0
      %v753 = vadd.f32 %v680, %v752
      %v754 = vpop.f32.mrb[0].mxu0
      %755 = vdwg.mxu0
      %v756 = vtanh.pop %v753
      %v757 = vmul.f32 %v756, 2.0
      %vm758 = vcmask 124928
      %759 = vst.msk [vmem:[%s361] sm:$0x7] %vm758, %v757
      %p760 = scmp.lt.s32.totalorder %s24, 1
      %s761 = scalar_select %p760, %s24, 1
      %p762 = scmp.lt.s32.totalorder %s25, 0
      %s763 = scalar_select %p762, %s25, 0
      %s764 = sadd.s32 %s763, %s761
      %s765 = smul.addr %s764, 4
      %s766 = scalar_lea.vmem %s9, %s765
      // Predicated region
      $region57: #{tpu_custom_call.1} parent=55 // pred_check
        %p767 = pneg %p248
      $region58: #{tpu_custom_call.1} parent=55 // pred_check_branch
        %769 = sbr.rel (%p767) target = $region60
      $region59: #{tpu_custom_call.1} parent=55 // pred_region
        _
      $region60: #{tpu_custom_call.1} parent=55 // pred_fallthru
        _
    $region56: #{tpu_custom_call.1} parent=5 // pred_fallthru
      _
    %p770 = scmp.le.s32.totalorder 2, %s15
    // Predicated region
    $region61: #{tpu_custom_call.1} parent=5 // pred_check
      %p771 = pneg %p770
    $region62: #{tpu_custom_call.1} parent=5 // pred_check_branch
      %773 = sbr.rel (%p771) target = $region64
    $region63: #{tpu_custom_call.1} parent=5 // pred_region
      %s774 = ssub.s32 %s15, 2
      // Predicated region
      $region65: #{tpu_custom_call.1} parent=63 // pred_check
        %p775 = pneg %p254
      $region66: #{tpu_custom_call.1} parent=63 // pred_check_branch
        %777 = sbr.rel (%p775) target = $region68
      $region67: #{tpu_custom_call.1} parent=63 // pred_region
        %p778 = scmp.lt.s32.totalorder %s26, 1
        %s779 = scalar_select %p778, %s26, 1
        %p780 = scmp.lt.s32.totalorder %s27, 0
        %s781 = scalar_select %p780, %s27, 0
        %s782 = sadd.s32 %s781, %s779
        %s783 = smul.addr %s782, 4
        %s784 = scalar_lea.vmem %s9, %s783
      $region68: #{tpu_custom_call.1} parent=63 // pred_fallthru
        _
    $region64: #{tpu_custom_call.1} parent=5 // pred_fallthru
      _
  $region6: #{tpu_custom_call.1} parent=0 // loop_footer
    %s19 = sadd.s32 1, %s15
  $region7: #{tpu_custom_call.1} parent=0 // loop_footer_branch
    %14 = sbr.rel target = $region3
  $region8: #{tpu_custom_call.1} parent=0 // loop_exit
    _

</llo_original>
